<compile_context>
chip_gen: v5e
topology: v5e:2x2
jax: 0.10.0
libtpu: 0.0.40
codegen_flags: <defaults>
</compile_context>

<pallas_src>
import jax
import jax.numpy as jnp
from jax import lax
from jax.experimental import pallas as pl
from jax.experimental.pallas import tpu as pltpu


def _make_vac_kernel(T_total, K, H, needs_mask):
    def kernel(h0_ref, c0_ref, feat_ref, key_ref, prior_ref, w_ref,
               h_out_ref, c_out_ref, h_ref, c_ref):
        blk = pl.program_id(0)

        # Initialize the carried state once; it lives in VMEM scratch across
        # the whole grid.
        @pl.when(blk == 0)
        def _():
            h_ref[...] = h0_ref[...]
            c_ref[...] = c0_ref[...]

        # Static views into the packed, lane-tile-aligned weight buffer.
        w_hcomb = w_ref[0:H, :]                      # [H, 5H] = [Whh_T | Wh]
        w_xv = w_ref[H:2 * H, 0:4 * H]               # [C, 4H] = Wv @ Wih_T
        v_row = w_ref[2 * H:2 * H + 1, 0:H]          # [1, H]
        bias = w_ref[2 * H + 1:2 * H + 2, 0:4 * H]   # [1, 4H] = b_ih + b_hh

        def step(k, carry):
            h, c = carry
            feat = feat_ref[k]                       # [B, N, C]
            key = key_ref[k]                         # [B, N, H] (precomputed)
            prior = prior_ref[k]                     # [B, N]

            # Fused h projection: recurrent gate contribution + attn query.
            # Gate block occupies lanes 0:4H (tile aligned), query 4H:5H.
            h_all = jnp.dot(h, w_hcomb, preferred_element_type=jnp.float32)
            h_gates = h_all[:, :4 * H]               # [B, 4H]
            query = h_all[:, 4 * H:]                 # [B, H]

            # Additive attention scores: VPU multiply + lane reduction
            # (no [H,1] matmul on the critical path).
            s = jnp.tanh(query[:, None, :] + key)    # [B, N, H]
            scores = jnp.sum(s * v_row[None, :, :], axis=-1)   # [B, N]

            # Softmax with the 1/Z factor cancelled into the denominator:
            # p = e/Z, attn = p*prior  =>  x = sum(e*prior*feat) /
            #                               max(sum(e*prior), 1e-5 * Z).
            m = jnp.max(scores, axis=-1, keepdims=True)
            e = jnp.exp(scores - m)                  # [B, N]
            z = jnp.sum(e, axis=-1, keepdims=True)   # [B, 1]
            a = e * prior                            # unnormalized attention
            s_sum = jnp.sum(a, axis=-1, keepdims=True)          # [B, 1]
            weighted = jnp.sum(a[:, :, None] * feat, axis=1)    # [B, C]
            denom = jnp.maximum(s_sum, 1e-05 * z)    # [B, 1]

            # LSTMCell (PyTorch gate order i, f, g, o); Wv folded into w_xv.
            gates = (jnp.dot(weighted / denom, w_xv,
                             preferred_element_type=jnp.float32)
                     + h_gates + bias)               # [B, 4H]
            i_g = jax.nn.sigmoid(gates[:, 0 * H:1 * H])
            f_g = jax.nn.sigmoid(gates[:, 1 * H:2 * H])
            g_g = jnp.tanh(gates[:, 2 * H:3 * H])
            o_g = jax.nn.sigmoid(gates[:, 3 * H:4 * H])

            c_new = f_g * c + i_g * g_g
            h_new = o_g * jnp.tanh(c_new)

            if needs_mask:
                # Guard padded trailing frames (only present when K ∤ T).
                valid = (blk * K + k) < T_total
                h_new = jnp.where(valid, h_new, h)
                c_new = jnp.where(valid, c_new, c)
            return h_new, c_new

        h_fin, c_fin = lax.fori_loop(0, K, step, (h_ref[...], c_ref[...]),
                                     unroll=True)
        h_ref[...] = h_fin
        c_ref[...] = c_fin
        # Write live state every grid step (robust to output revisit semantics;
        # it's a single tiny block).
        h_out_ref[...] = h_fin
        c_out_ref[...] = c_fin

    return kernel


def _pack_weights(params, H, C):
    """Pack static parameters into one lane-tile-aligned f32 buffer.

    Row layout:
      [0:H,   0:4H] = Whh_T      [0:H, 4H:5H] = Wh      (fused h projection)
      [H:2H,  0:4H] = Wv @ Wih_T                        (folded value/input weight)
      [2H,    0:H ] = v (as a row)
      [2H+1,  0:4H] = b_ih + b_hh
    """
    assert C == H, "module implicitly requires attn_size == hidden_size"
    f32 = jnp.float32
    w = jnp.zeros((2 * H + 2, 5 * H), f32)
    w = w.at[0:H, 0:4 * H].set(params["Whh_T"].astype(f32))
    w = w.at[0:H, 4 * H:5 * H].set(params["Wh"].astype(f32))
    w = w.at[H:2 * H, 0:4 * H].set(
        params["Wv"].astype(f32) @ params["Wih_T"].astype(f32))
    w = w.at[2 * H, 0:H].set(params["v"].reshape(-1).astype(f32))
    w = w.at[2 * H + 1, 0:4 * H].set(
        (params["b_ih"] + params["b_hh"]).astype(f32))
    return w


def visual_attention_rollout(hidden, feat_seq, prior_seq, params,
                             block_frames=8):
    """Run T recurrent attention steps inside a single pallas_call.

    hidden    : (h0, c0), each [B, H]
    feat_seq  : [T, B, N, C]   (kernel-friendly layout; no wrapper transpose)
    prior_seq : [T, B, N]
    """
    h0, c0 = hidden
    T, B, N, C = feat_seq.shape
    H = h0.shape[1]
    assert C == H, "module implicitly requires attn_size == hidden_size"

    feat = feat_seq.astype(jnp.float32)
    prior = prior_seq.astype(jnp.float32)

    # Hoist the h-independent key projection out of the recurrence: one tall
    # matmul over all T frames instead of T tiny matmuls on the serial chain.
    key_seq = jnp.einsum("tbnc,ch->tbnh", feat,
                         params["Wk"].astype(jnp.float32))

    K = min(block_frames, T)
    n_blocks = pl.cdiv(T, K)
    T_pad = n_blocks * K
    needs_mask = T_pad != T
    if needs_mask:
        pad = T_pad - T
        feat = jnp.pad(feat, ((0, pad), (0, 0), (0, 0), (0, 0)))
        key_seq = jnp.pad(key_seq, ((0, pad), (0, 0), (0, 0), (0, 0)))
        prior = jnp.pad(prior, ((0, pad), (0, 0), (0, 0)))

    w_packed = _pack_weights(params, H, C)
    kernel = _make_vac_kernel(T, K, H, needs_mask)

    h_out, c_out = pl.pallas_call(
        kernel,
        out_shape=(jax.ShapeDtypeStruct((B, H), jnp.float32),
                   jax.ShapeDtypeStruct((B, H), jnp.float32)),
        grid=(n_blocks,),
        in_specs=[
            pl.BlockSpec((B, H), lambda t: (0, 0)),               # h0
            pl.BlockSpec((B, H), lambda t: (0, 0)),               # c0
            pl.BlockSpec((K, B, N, C), lambda t: (t, 0, 0, 0)),   # feat block
            pl.BlockSpec((K, B, N, H), lambda t: (t, 0, 0, 0)),   # key block
            pl.BlockSpec((K, B, N), lambda t: (t, 0, 0)),         # prior block
            pl.BlockSpec((2 * H + 2, 5 * H), lambda t: (0, 0)),   # weights
        ],
        out_specs=(pl.BlockSpec((B, H), lambda t: (0, 0)),
                   pl.BlockSpec((B, H), lambda t: (0, 0))),
        scratch_shapes=[pltpu.VMEM((B, H), jnp.float32),           # h carry
                        pltpu.VMEM((B, H), jnp.float32)],          # c carry
        compiler_params=pltpu.CompilerParams(
            dimension_semantics=("arbitrary",)),
    )(h0.astype(jnp.float32), c0.astype(jnp.float32),
      feat, key_seq, prior, w_packed)

    return h_out, c_out


def visual_attention_cell(hidden, feat_map, prior_map, params):
    """Single-step forward, matching VisualAttentionCell.forward semantics.

    feat_map [N, B, C], prior_map [N, B], hidden = (h0, c0) each [B, H].
    """
    feat = jnp.transpose(feat_map, (1, 0, 2))[None]   # [1, B, N, C]
    prior = jnp.transpose(prior_map, (1, 0))[None]    # [1, B, N]
    return visual_attention_rollout(hidden, feat, prior, params)


def _reference_step(hidden, feat_map, prior_map, params):
    """Pure-JAX reference mirroring the PyTorch forward exactly."""
    h0, c0 = hidden
    N, B, C = feat_map.shape
    H = h0.shape[1]
    query = h0 @ params["Wh"]
    key = (feat_map.reshape(-1, C) @ params["Wk"]).reshape(N, B, H)
    value = (feat_map.reshape(-1, C) @ params["Wv"]).reshape(N, B, C)
    scores = jnp.tanh(query[None] + key).reshape(-1, H) @ params["v"]
    scores = jax.nn.softmax(scores.reshape(N, B), axis=0)
    attn = scores * prior_map
    context = (attn[:, :, None] * value).sum(0)
    sum_w = jnp.clip(attn.sum(0), 1e-05, None)[:, None]
    x = context / sum_w
    gates = (x @ params["Wih_T"] + params["b_ih"]
             + h0 @ params["Whh_T"] + params["b_hh"])
    i_g, f_g, g_g, o_g = jnp.split(gates, 4, axis=1)
    c1 = jax.nn.sigmoid(f_g) * c0 + jax.nn.sigmoid(i_g) * jnp.tanh(g_g)
    h1 = jax.nn.sigmoid(o_g) * jnp.tanh(c1)
    return h1, c1


if __name__ == "__main__":
    # NOTE: the PyTorch module implicitly requires hidden_size == attn_size.
    B, N = 2, 64            # batch, spatial positions (8x8 map)
    H = A = 32              # hidden_size == attn_size == n_channels
    T = 6                   # frames for the fused rollout test

    key = jax.random.PRNGKey(0)
    ks = jax.random.split(key, 12)
    f32 = jnp.float32

    h0 = jax.random.normal(ks[0], (B, H), f32)
    c0 = jax.random.normal(ks[1], (B, H), f32)
    # Generate directly in the kernel-friendly [T, B, N, C] / [T, B, N] layout
    # (avoids a wrapper-side transpose of the dominant tensor).
    feat_seq = jax.random.normal(ks[2], (T, B, N, A), f32)
    prior_seq = jax.nn.softmax(jax.random.normal(ks[3], (T, B, N), f32), axis=-1)

    scale = 0.1
    params = {
        "Wh": scale * jax.random.normal(ks[4], (H, H), f32),
        "Wk": scale * jax.random.normal(ks[5], (A, H), f32),
        "Wv": scale * jax.random.normal(ks[6], (A, H), f32),
        "v": scale * jax.random.normal(ks[7], (H, 1), f32),
        # nn.LSTMCell weights, stored pre-transposed: [in_dim, 4H]
        "Wih_T": scale * jax.random.normal(ks[8], (A, 4 * H), f32),
        "Whh_T": scale * jax.random.normal(ks[9], (H, 4 * H), f32),
        "b_ih": scale * jax.random.normal(ks[10], (4 * H,), f32),
        "b_hh": scale * jax.random.normal(ks[11], (4 * H,), f32),
    }

    # Module-layout views ([N, B, C] / [N, B]) for the reference.
    feat_nbc = jnp.transpose(feat_seq, (0, 2, 1, 3))
    prior_nb = jnp.transpose(prior_seq, (0, 2, 1))

    # --- single step (module semantics) ---
    h1, c1 = visual_attention_cell((h0, c0), feat_nbc[0], prior_nb[0], params)
    jax.block_until_ready((h1, c1))
    h1_ref, c1_ref = _reference_step((h0, c0), feat_nbc[0], prior_nb[0], params)
    assert jnp.allclose(h1, h1_ref, atol=1e-4, rtol=1e-4)
    assert jnp.allclose(c1, c1_ref, atol=1e-4, rtol=1e-4)

    # --- T-step recurrence fused into one pallas_call (single frame block) ---
    hT, cT = visual_attention_rollout((h0, c0), feat_seq, prior_seq, params)
    jax.block_until_ready((hT, cT))
    hr, cr = h0, c0
    for t in range(T):
        hr, cr = _reference_step((hr, cr), feat_nbc[t], prior_nb[t], params)
    assert jnp.allclose(hT, hr, atol=2e-4, rtol=2e-4)
    assert jnp.allclose(cT, cr, atol=2e-4, rtol=2e-4)

    # --- multi-block path with tail masking (K ∤ T) ---
    hT2, cT2 = visual_attention_rollout((h0, c0), feat_seq, prior_seq, params,
                                        block_frames=4)
    jax.block_until_ready((hT2, cT2))
    assert jnp.allclose(hT2, hr, atol=2e-4, rtol=2e-4)
    assert jnp.allclose(cT2, cr, atol=2e-4, rtol=2e-4)

    print("KERNEL_OK")
</pallas_src>

<mosaic_0001>
module attributes {stable_mosaic.version = 11 : i64} {
  func.func @kernel(%arg0: i32, %arg1: memref<2x32xf32, #tpu.memory_space<vmem>>, %arg2: memref<2x32xf32, #tpu.memory_space<vmem>>, %arg3: memref<1x2x64x32xf32, #tpu.memory_space<vmem>>, %arg4: memref<1x2x64x32xf32, #tpu.memory_space<vmem>>, %arg5: memref<1x2x64xf32, #tpu.memory_space<vmem>>, %arg6: memref<66x160xf32, #tpu.memory_space<vmem>>, %arg7: memref<2x32xf32, #tpu.memory_space<vmem>>, %arg8: memref<2x32xf32, #tpu.memory_space<vmem>>, %arg9: memref<2x32xf32, #tpu.memory_space<vmem>>, %arg10: memref<2x32xf32, #tpu.memory_space<vmem>>) attributes {dimension_semantics = [#tpu.dimension_semantics<arbitrary>], iteration_bounds = array<i64: 1>, scalar_prefetch = 0 : i64, scratch_operands = 2 : i64, tpu.core_type = #tpu.core_type<tc>, window_params = [{pipeline_mode = #tpu.pipeline_mode<synchronous>, transform_indices = @transform_0, window_bounds = array<i64: 2, 32>}, {pipeline_mode = #tpu.pipeline_mode<synchronous>, transform_indices = @transform_1, window_bounds = array<i64: 2, 32>}, {transform_indices = @transform_2, window_bounds = array<i64: 1, 2, 64, 32>}, {transform_indices = @transform_3, window_bounds = array<i64: 1, 2, 64, 32>}, {transform_indices = @transform_4, window_bounds = array<i64: 1, 2, 64>}, {pipeline_mode = #tpu.pipeline_mode<synchronous>, transform_indices = @transform_5, window_bounds = array<i64: 66, 160>}, {pipeline_mode = #tpu.pipeline_mode<synchronous>, transform_indices = @transform_6, window_bounds = array<i64: 2, 32>}, {pipeline_mode = #tpu.pipeline_mode<synchronous>, transform_indices = @transform_7, window_bounds = array<i64: 2, 32>}]} {
    %c0_i32 = arith.constant 0 : i32
    %0 = arith.cmpi eq, %arg0, %c0_i32 : i32
    %1 = arith.extui %0 : i1 to i32
    %c0_i32_0 = arith.constant 0 : i32
    %2 = arith.cmpi ne, %1, %c0_i32_0 : i32
    scf.if %2 {
      %c0_36 = arith.constant 0 : index
      %c0_37 = arith.constant 0 : index
      %81 = vector.load %arg1[%c0_36, %c0_37] : memref<2x32xf32, #tpu.memory_space<vmem>>, vector<2x32xf32>
      %c0_38 = arith.constant 0 : index
      %c0_39 = arith.constant 0 : index
      %82 = vector.load %arg9[%c0_38, %c0_39] : memref<2x32xf32, #tpu.memory_space<vmem>>, vector<2x32xf32>
      tpu.vector_store %arg9[%c0_38, %c0_39], %81 {strides = array<i32>} : memref<2x32xf32, #tpu.memory_space<vmem>>, vector<2x32xf32>,
      %c0_40 = arith.constant 0 : index
      %c0_41 = arith.constant 0 : index
      %83 = vector.load %arg2[%c0_40, %c0_41] : memref<2x32xf32, #tpu.memory_space<vmem>>, vector<2x32xf32>
      %c0_42 = arith.constant 0 : index
      %c0_43 = arith.constant 0 : index
      %84 = vector.load %arg10[%c0_42, %c0_43] : memref<2x32xf32, #tpu.memory_space<vmem>>, vector<2x32xf32>
      tpu.vector_store %arg10[%c0_42, %c0_43], %83 {strides = array<i32>} : memref<2x32xf32, #tpu.memory_space<vmem>>, vector<2x32xf32>,
    } else {
    }
    %c0 = arith.constant 0 : index
    %c0_1 = arith.constant 0 : index
    %3 = vector.load %arg6[%c0, %c0_1] : memref<66x160xf32, #tpu.memory_space<vmem>>, vector<32x160xf32>
    %c32 = arith.constant 32 : index
    %c0_2 = arith.constant 0 : index
    %4 = vector.load %arg6[%c32, %c0_2] : memref<66x160xf32, #tpu.memory_space<vmem>>, vector<32x128xf32>
    %c64 = arith.constant 64 : index
    %c0_3 = arith.constant 0 : index
    %5 = vector.load %arg6[%c64, %c0_3] : memref<66x160xf32, #tpu.memory_space<vmem>>, vector<1x32xf32>
    %c65 = arith.constant 65 : index
    %c0_4 = arith.constant 0 : index
    %6 = vector.load %arg6[%c65, %c0_4] : memref<66x160xf32, #tpu.memory_space<vmem>>, vector<1x128xf32>
    %c0_5 = arith.constant 0 : index
    %c0_6 = arith.constant 0 : index
    %7 = vector.load %arg9[%c0_5, %c0_6] : memref<2x32xf32, #tpu.memory_space<vmem>>, vector<2x32xf32>
    %c0_7 = arith.constant 0 : index
    %c0_8 = arith.constant 0 : index
    %8 = vector.load %arg10[%c0_7, %c0_8] : memref<2x32xf32, #tpu.memory_space<vmem>>, vector<2x32xf32>
    %c0_i32_9 = arith.constant 0 : i32
    %9 = arith.index_cast %c0_i32_9 : i32 to index
    %c0_10 = arith.constant 0 : index
    %c0_11 = arith.constant 0 : index
    %c0_12 = arith.constant 0 : index
    %10 = vector.load %arg3[%9, %c0_10, %c0_11, %c0_12] : memref<1x2x64x32xf32, #tpu.memory_space<vmem>>, vector<1x2x64x32xf32>
    %11 = vector.shape_cast %10 : vector<1x2x64x32xf32> to vector<2x64x32xf32>
    %12 = arith.index_cast %c0_i32_9 : i32 to index
    %c0_13 = arith.constant 0 : index
    %c0_14 = arith.constant 0 : index
    %c0_15 = arith.constant 0 : index
    %13 = vector.load %arg4[%12, %c0_13, %c0_14, %c0_15] : memref<1x2x64x32xf32, #tpu.memory_space<vmem>>, vector<1x2x64x32xf32>
    %14 = vector.shape_cast %13 : vector<1x2x64x32xf32> to vector<2x64x32xf32>
    %15 = arith.index_cast %c0_i32_9 : i32 to index
    %c0_16 = arith.constant 0 : index
    %c0_17 = arith.constant 0 : index
    %16 = vector.load %arg5[%15, %c0_16, %c0_17] : memref<1x2x64xf32, #tpu.memory_space<vmem>>, vector<1x2x64xf32>
    %17 = vector.shape_cast %16 : vector<1x2x64xf32> to vector<2x64xf32>
    %cst = arith.constant dense<0.000000e+00> : vector<2x160xf32>
    %18 = tpu.matmul %7, %3, %cst {dimension_numbers = #tpu.dot_dimension_numbers<[1], [0], [0], [1], [0, 0, 1, 1], [], []>} : vector<2x32xf32>, vector<32x160xf32>, vector<2x160xf32> -> vector<2x160xf32>
    %19 = vector.extract_strided_slice %18 {offsets = [0, 0], sizes = [2, 128], strides = [1, 1]} : vector<2x160xf32> to vector<2x128xf32>
    %20 = vector.extract_strided_slice %18 {offsets = [0, 128], sizes = [2, 32], strides = [1, 1]} : vector<2x160xf32> to vector<2x32xf32>
    %21 = vector.shape_cast %20 : vector<2x32xf32> to vector<2x1x32xf32>
    %22 = vector.broadcast %21 : vector<2x1x32xf32> to vector<2x64x32xf32>
    %23 = arith.addf %22, %14 : vector<2x64x32xf32>
    %24 = math.tanh %23 : vector<2x64x32xf32>
    %25 = vector.shape_cast %5 : vector<1x32xf32> to vector<1x1x32xf32>
    %26 = vector.broadcast %25 : vector<1x1x32xf32> to vector<2x64x32xf32>
    %27 = arith.mulf %24, %26 : vector<2x64x32xf32>
    %cst_18 = arith.constant dense<0.000000e+00> : vector<2x64xf32>
    %28 = vector.multi_reduction <add>, %27, %cst_18 [2] : vector<2x64x32xf32> to vector<2x64xf32>
    %cst_19 = arith.constant dense<0xFF800000> : vector<2xf32>
    %29 = vector.multi_reduction <maximumf>, %28, %cst_19 [1] : vector<2x64xf32> to vector<2xf32>
    %30 = vector.shape_cast %29 : vector<2xf32> to vector<2x1xf32>
    %31 = vector.broadcast %30 : vector<2x1xf32> to vector<2x64xf32>
    %32 = arith.subf %28, %31 : vector<2x64xf32>
    %33 = math.exp %32 : vector<2x64xf32>
    %cst_20 = arith.constant dense<0.000000e+00> : vector<2xf32>
    %34 = vector.multi_reduction <add>, %33, %cst_20 [1] : vector<2x64xf32> to vector<2xf32>
    %35 = vector.shape_cast %34 : vector<2xf32> to vector<2x1xf32>
    %36 = arith.mulf %33, %17 : vector<2x64xf32>
    %cst_21 = arith.constant dense<0.000000e+00> : vector<2xf32>
    %37 = vector.multi_reduction <add>, %36, %cst_21 [1] : vector<2x64xf32> to vector<2xf32>
    %38 = vector.shape_cast %37 : vector<2xf32> to vector<2x1xf32>
    %39 = vector.shape_cast %36 : vector<2x64xf32> to vector<2x64x1xf32>
    %40 = vector.broadcast %39 : vector<2x64x1xf32> to vector<2x64x32xf32>
    %41 = arith.mulf %40, %11 : vector<2x64x32xf32>
    %cst_22 = arith.constant dense<0.000000e+00> : vector<2x32xf32>
    %42 = vector.multi_reduction <add>, %41, %cst_22 [1] : vector<2x64x32xf32> to vector<2x32xf32>
    %cst_23 = arith.constant 9.99999974E-6 : f32
    %43 = vector.broadcast %cst_23 : f32 to vector<2x1xf32>
    %44 = arith.mulf %43, %35 : vector<2x1xf32>
    %45 = arith.maximumf %38, %44 : vector<2x1xf32>
    %46 = vector.broadcast %45 : vector<2x1xf32> to vector<2x32xf32>
    %47 = arith.divf %42, %46 : vector<2x32xf32>
    %cst_24 = arith.constant dense<0.000000e+00> : vector<2x128xf32>
    %48 = tpu.matmul %47, %4, %cst_24 {dimension_numbers = #tpu.dot_dimension_numbers<[1], [0], [0], [1], [0, 0, 1, 1], [], []>} : vector<2x32xf32>, vector<32x128xf32>, vector<2x128xf32> -> vector<2x128xf32>
    %49 = arith.addf %48, %19 : vector<2x128xf32>
    %50 = vector.broadcast %6 : vector<1x128xf32> to vector<2x128xf32>
    %51 = arith.addf %49, %50 : vector<2x128xf32>
    %52 = vector.extract_strided_slice %51 {offsets = [0, 0], sizes = [2, 32], strides = [1, 1]} : vector<2x128xf32> to vector<2x32xf32>
    %53 = arith.negf %52 : vector<2x32xf32>
    %54 = math.exp %53 : vector<2x32xf32>
    %cst_25 = arith.constant 1.000000e+00 : f32
    %55 = vector.broadcast %cst_25 : f32 to vector<2x32xf32>
    %56 = arith.addf %55, %54 : vector<2x32xf32>
    %57 = arith.divf %55, %56 : vector<2x32xf32>
    %58 = vector.extract_strided_slice %51 {offsets = [0, 32], sizes = [2, 32], strides = [1, 1]} : vector<2x128xf32> to vector<2x32xf32>
    %59 = arith.negf %58 : vector<2x32xf32>
    %60 = math.exp %59 : vector<2x32xf32>
    %cst_26 = arith.constant 1.000000e+00 : f32
    %61 = vector.broadcast %cst_26 : f32 to vector<2x32xf32>
    %62 = arith.addf %61, %60 : vector<2x32xf32>
    %63 = arith.divf %61, %62 : vector<2x32xf32>
    %64 = vector.extract_strided_slice %51 {offsets = [0, 64], sizes = [2, 32], strides = [1, 1]} : vector<2x128xf32> to vector<2x32xf32>
    %65 = math.tanh %64 : vector<2x32xf32>
    %66 = vector.extract_strided_slice %51 {offsets = [0, 96], sizes = [2, 32], strides = [1, 1]} : vector<2x128xf32> to vector<2x32xf32>
    %67 = arith.negf %66 : vector<2x32xf32>
    %68 = math.exp %67 : vector<2x32xf32>
    %cst_27 = arith.constant 1.000000e+00 : f32
    %69 = vector.broadcast %cst_27 : f32 to vector<2x32xf32>
    %70 = arith.addf %69, %68 : vector<2x32xf32>
    %71 = arith.divf %69, %70 : vector<2x32xf32>
    %72 = arith.mulf %63, %8 : vector<2x32xf32>
    %73 = arith.mulf %57, %65 : vector<2x32xf32>
    %74 = arith.addf %72, %73 : vector<2x32xf32>
    %75 = math.tanh %74 : vector<2x32xf32>
    %76 = arith.mulf %71, %75 : vector<2x32xf32>
    %c1_i32 = arith.constant 1 : i32
    %c0_28 = arith.constant 0 : index
    %c0_29 = arith.constant 0 : index
    %77 = vector.load %arg9[%c0_28, %c0_29] : memref<2x32xf32, #tpu.memory_space<vmem>>, vector<2x32xf32>
    tpu.vector_store %arg9[%c0_28, %c0_29], %76 {strides = array<i32>} : memref<2x32xf32, #tpu.memory_space<vmem>>, vector<2x32xf32>,
    %c0_30 = arith.constant 0 : index
    %c0_31 = arith.constant 0 : index
    %78 = vector.load %arg10[%c0_30, %c0_31] : memref<2x32xf32, #tpu.memory_space<vmem>>, vector<2x32xf32>
    tpu.vector_store %arg10[%c0_30, %c0_31], %74 {strides = array<i32>} : memref<2x32xf32, #tpu.memory_space<vmem>>, vector<2x32xf32>,
    %c0_32 = arith.constant 0 : index
    %c0_33 = arith.constant 0 : index
    %79 = vector.load %arg7[%c0_32, %c0_33] : memref<2x32xf32, #tpu.memory_space<vmem>>, vector<2x32xf32>
    tpu.vector_store %arg7[%c0_32, %c0_33], %76 {strides = array<i32>} : memref<2x32xf32, #tpu.memory_space<vmem>>, vector<2x32xf32>,
    %c0_34 = arith.constant 0 : index
    %c0_35 = arith.constant 0 : index
    %80 = vector.load %arg8[%c0_34, %c0_35] : memref<2x32xf32, #tpu.memory_space<vmem>>, vector<2x32xf32>
    tpu.vector_store %arg8[%c0_34, %c0_35], %74 {strides = array<i32>} : memref<2x32xf32, #tpu.memory_space<vmem>>, vector<2x32xf32>,
    return
  }
  func.func @transform_0(%arg0: i32) -> (i32, i32) {
    %c0_i32 = arith.constant 0 : i32
    %c0_i32_0 = arith.constant 0 : i32
    %c0_i32_1 = arith.constant 0 : i32
    return %c0_i32, %c0_i32_0 : i32, i32
  }
  func.func @transform_1(%arg0: i32) -> (i32, i32) {
    %c0_i32 = arith.constant 0 : i32
    %c0_i32_0 = arith.constant 0 : i32
    %c0_i32_1 = arith.constant 0 : i32
    return %c0_i32, %c0_i32_0 : i32, i32
  }
  func.func @transform_2(%arg0: i32) -> (i32, i32, i32, i32) {
    %c0_i32 = arith.constant 0 : i32
    %c0_i32_0 = arith.constant 0 : i32
    %c0_i32_1 = arith.constant 0 : i32
    %c0_i32_2 = arith.constant 0 : i32
    return %arg0, %c0_i32, %c0_i32_0, %c0_i32_1 : i32, i32, i32, i32
  }
  func.func @transform_3(%arg0: i32) -> (i32, i32, i32, i32) {
    %c0_i32 = arith.constant 0 : i32
    %c0_i32_0 = arith.constant 0 : i32
    %c0_i32_1 = arith.constant 0 : i32
    %c0_i32_2 = arith.constant 0 : i32
    return %arg0, %c0_i32, %c0_i32_0, %c0_i32_1 : i32, i32, i32, i32
  }
  func.func @transform_4(%arg0: i32) -> (i32, i32, i32) {
    %c0_i32 = arith.constant 0 : i32
    %c0_i32_0 = arith.constant 0 : i32
    %c0_i32_1 = arith.constant 0 : i32
    return %arg0, %c0_i32, %c0_i32_0 : i32, i32, i32
  }
  func.func @transform_5(%arg0: i32) -> (i32, i32) {
    %c0_i32 = arith.constant 0 : i32
    %c0_i32_0 = arith.constant 0 : i32
    %c0_i32_1 = arith.constant 0 : i32
    return %c0_i32, %c0_i32_0 : i32, i32
  }
  func.func @transform_6(%arg0: i32) -> (i32, i32) {
    %c0_i32 = arith.constant 0 : i32
    %c0_i32_0 = arith.constant 0 : i32
    %c0_i32_1 = arith.constant 0 : i32
    return %c0_i32, %c0_i32_0 : i32, i32
  }
  func.func @transform_7(%arg0: i32) -> (i32, i32) {
    %c0_i32 = arith.constant 0 : i32
    %c0_i32_0 = arith.constant 0 : i32
    %c0_i32_1 = arith.constant 0 : i32
    return %c0_i32, %c0_i32_0 : i32, i32
  }
}

</mosaic_0001>

<llo_original>
// kernel: tpu_custom_call.1
$region0: #{tpu_custom_call.1}
  #allocation0 [shape = 'u32[]', space=smem, size = 0x4, offset = 0x4, fixed_abs, tag = 'smem constant byte address 0x4 - core index']
  #allocation1 [shape = 'u32[72,128]{1,0:T(1,128)}', space=vmem, size = 0x9000, scoped, tag = 'internal scratch']
  #allocation2 [shape = 'f32[2,32]{1,0:T(2,128)}', space=vmem, size = 0x400, scoped, tag = 'scratch operand']
  #allocation3 [shape = 'f32[2,32]{1,0:T(2,128)}', space=vmem, size = 0x400, scoped, tag = 'scratch operand']
  %s0 = inlined_call_operand.vmem [shape: f32[2,32], index: 0, kind: input, shape index: {}]
  %s1 = inlined_call_operand.vmem [shape: f32[2,32], index: 1, kind: input, shape index: {}]
  %s2 = inlined_call_operand.vmem [shape: f32[1,2,64,32], index: 2, kind: input, shape index: {}]
  %s3 = inlined_call_operand.vmem [shape: f32[1,2,64,32], index: 3, kind: input, shape index: {}]
  %s4 = inlined_call_operand.vmem [shape: f32[1,2,64], index: 4, kind: input, shape index: {}]
  %s5 = inlined_call_operand.vmem [shape: f32[66,160], index: 5, kind: input, shape index: {}]
  %s6 = inlined_call_operand.hbm [shape: f32[2,32], index: 6, kind: output, shape index: {0}]
  %s7 = inlined_call_operand.hbm [shape: f32[2,32], index: 7, kind: output, shape index: {1}]
  %8 = xla_tuple %s6, %s7
  %s9 = sld [smem:[#allocation0]]
  $region46: #{tpu_custom_call.1} parent=0
    _
  %s11 = ssub.s32 1, %s9
  %s12 = scalar_select 0, %s11, %s9
  $region1: #{tpu_custom_call.1} parent=0
    #allocation4 [shape = 'u8[1024]{0}', space=vmem, size = 0x400, scoped, tag = 'output window, operand 0, single buffered']
    #allocation5 [shape = 's32[1]{0}', space=sflag, size = 0x4, scoped, tag = 'scoped memory for tpu_custom_call.1']
    #allocation6 [shape = 'u8[1024]{0}', space=vmem, size = 0x400, scoped, tag = 'output window, operand 1, single buffered']
    #allocation7 [shape = 's32[1]{0}', space=sflag, size = 0x4, scoped, tag = 'scoped memory for tpu_custom_call.1']
    %13 = vsyncpa [#allocation5], 0
    %14 = vsyncpa [#allocation7], 0
    // Predicated region
    $region2: #{tpu_custom_call.1} parent=1 // pred_check
      _
    $region3: #{tpu_custom_call.1} parent=1 // pred_check_branch
      %16 = sbr.rel (0) target = $region5
    $region4: #{tpu_custom_call.1} parent=1 // pred_region
      _
    $region5: #{tpu_custom_call.1} parent=1 // pred_fallthru
      _
    // Predicated region
    $region6: #{tpu_custom_call.1} parent=1 // pred_check
      _
    $region7: #{tpu_custom_call.1} parent=1 // pred_check_branch
      %18 = sbr.rel (0) target = $region9
    $region8: #{tpu_custom_call.1} parent=1 // pred_region
      _
    $region9: #{tpu_custom_call.1} parent=1 // pred_fallthru
      _
    // Predicated region
    $region10: #{tpu_custom_call.1} parent=1 // pred_check
      _
    $region11: #{tpu_custom_call.1} parent=1 // pred_check_branch
      %20 = sbr.rel (0) target = $region13
    $region12: #{tpu_custom_call.1} parent=1 // pred_region
      _
    $region13: #{tpu_custom_call.1} parent=1 // pred_fallthru
      _
    // Predicated region
    $region14: #{tpu_custom_call.1} parent=1 // pred_check
      _
    $region15: #{tpu_custom_call.1} parent=1 // pred_check_branch
      %22 = sbr.rel (0) target = $region17
    $region16: #{tpu_custom_call.1} parent=1 // pred_region
      _
    $region17: #{tpu_custom_call.1} parent=1 // pred_fallthru
      _
    // Predicated region
    $region18: #{tpu_custom_call.1} parent=1 // pred_check
      _
    $region19: #{tpu_custom_call.1} parent=1 // pred_check_branch
      %24 = sbr.rel (0) target = $region21
    $region20: #{tpu_custom_call.1} parent=1 // pred_region
      _
    $region21: #{tpu_custom_call.1} parent=1 // pred_fallthru
      _
    // Predicated region
    $region22: #{tpu_custom_call.1} parent=1 // pred_check
      _
    $region23: #{tpu_custom_call.1} parent=1 // pred_check_branch
      %26 = sbr.rel (0) target = $region25
    $region24: #{tpu_custom_call.1} parent=1 // pred_region
      _
    $region25: #{tpu_custom_call.1} parent=1 // pred_fallthru
      _
    %p27 = scmp.eq.s32.totalorder 0, 0
    // Predicated region
    $region26: #{tpu_custom_call.1} parent=1 // pred_check
      %p28 = pneg %p27
    $region27: #{tpu_custom_call.1} parent=1 // pred_check_branch
      %30 = sbr.rel (%p28) target = $region29
    $region28: #{tpu_custom_call.1} parent=1 // pred_region
      %v31 = vld [vmem:[%s0] sm:$0x3]
      %vm32 = vcmask 254976
      %33 = vst.msk [vmem:[#allocation2] sm:$0x3] %vm32, %v31
      %v34 = vld [vmem:[%s1] sm:$0x3]
      %35 = vst.msk [vmem:[#allocation3] sm:$0x3] %vm32, %v34
    $region29: #{tpu_custom_call.1} parent=1 // pred_fallthru
      _
    %v36 = vld [vmem:[%s5] sm:$0xff]
    %v37 = vld [vmem:[%s5 + $0x8] sm:$0xff]
    %v38 = vld [vmem:[%s5 + $0x10] sm:$0xff]
    %v39 = vld [vmem:[%s5 + $0x18] sm:$0xff]
    %v40 = vld [vmem:[%s5 + $0x20] sm:$0xff]
    %v41 = vld [vmem:[%s5 + $0x28] sm:$0xff]
    %v42 = vld [vmem:[%s5 + $0x30] sm:$0xff]
    %v43 = vld [vmem:[%s5 + $0x38] sm:$0xff]
    %v44 = vld [vmem:[%s5 + $0x40] sm:$0xff]
    %v45 = vld [vmem:[%s5 + $0x50] sm:$0xff]
    %v46 = vld [vmem:[%s5 + $0x60] sm:$0xff]
    %v47 = vld [vmem:[%s5 + $0x70] sm:$0xff]
    %v48 = vld [vmem:[%s5 + $0x80] ss:$0 sm:$0xff]
    %v49 = vld [vmem:[%s5 + $0x81] ss:$0 sm:$0xff]
    %v50 = vld [vmem:[#allocation2] sm:$0x3]
    %v51 = vld [vmem:[#allocation3] sm:$0x3]
    %v52 = vld [vmem:[%s2] sm:$0xff]
    %v53 = vld [vmem:[%s2 + $0x8] sm:$0xff]
    %v54 = vld [vmem:[%s2 + $0x10] sm:$0xff]
    %v55 = vld [vmem:[%s2 + $0x18] sm:$0xff]
    %v56 = vld [vmem:[%s2 + $0x20] sm:$0xff]
    %v57 = vld [vmem:[%s2 + $0x28] sm:$0xff]
    %v58 = vld [vmem:[%s2 + $0x30] sm:$0xff]
    %v59 = vld [vmem:[%s2 + $0x38] sm:$0xff]
    %v60 = vld [vmem:[%s2 + $0x40] sm:$0xff]
    %v61 = vld [vmem:[%s2 + $0x48] sm:$0xff]
    %v62 = vld [vmem:[%s2 + $0x50] sm:$0xff]
    %v63 = vld [vmem:[%s2 + $0x58] sm:$0xff]
    %v64 = vld [vmem:[%s2 + $0x60] sm:$0xff]
    %v65 = vld [vmem:[%s2 + $0x68] sm:$0xff]
    %v66 = vld [vmem:[%s2 + $0x70] sm:$0xff]
    %v67 = vld [vmem:[%s2 + $0x78] sm:$0xff]
    %v68 = vld [vmem:[%s3] sm:$0xff]
    %v69 = vld [vmem:[%s3 + $0x8] sm:$0xff]
    %v70 = vld [vmem:[%s3 + $0x10] sm:$0xff]
    %v71 = vld [vmem:[%s3 + $0x18] sm:$0xff]
    %v72 = vld [vmem:[%s3 + $0x20] sm:$0xff]
    %v73 = vld [vmem:[%s3 + $0x28] sm:$0xff]
    %v74 = vld [vmem:[%s3 + $0x30] sm:$0xff]
    %v75 = vld [vmem:[%s3 + $0x38] sm:$0xff]
    %v76 = vld [vmem:[%s3 + $0x40] sm:$0xff]
    %v77 = vld [vmem:[%s3 + $0x48] sm:$0xff]
    %v78 = vld [vmem:[%s3 + $0x50] sm:$0xff]
    %v79 = vld [vmem:[%s3 + $0x58] sm:$0xff]
    %v80 = vld [vmem:[%s3 + $0x60] sm:$0xff]
    %v81 = vld [vmem:[%s3 + $0x68] sm:$0xff]
    %v82 = vld [vmem:[%s3 + $0x70] sm:$0xff]
    %v83 = vld [vmem:[%s3 + $0x78] sm:$0xff]
    %v84 = vld [vmem:[%s4] sm:$0x3]
    %vm85 = vcmask 261120
    %v87 = vsel %vm85, %v50, 0
    %89 = vmatpush.msra.mxu0 0.0
    %90 = vmatpush.msra.mxu0 0.0
    %91 = vmatpush.msra.mxu0 0.0
    %92 = vmatpush.msra.mxu0 0.0
    %93 = vmatpush.msra.mxu0 0.0
    %94 = vmatpush.msra.mxu0 0.0
    %95 = vmatpush.msra.mxu0 0.0
    %96 = vmatpush.msra.mxu0 0.0
    %97 = vmatpush.msra.mxu0 0.0
    %98 = vmatpush.msra.mxu0 0.0
    %99 = vmatpush.msra.mxu0 0.0
    %100 = vmatpush.msra.mxu0 0.0
    %101 = vmatpush.msra.mxu0 %v42
    %102 = vmatpush.msra.mxu0 %v40
    %103 = vmatpush.msra.mxu0 %v38
    %104 = vmatpush.msra.mxu0 %v36
    %105 = vmatmul.f32.gmra.mxu0 %v87
    %v106 = vpop.f32.mrf.mxu0
    %v107 = vadd.f32 0.0, %v106
    %108 = vdwg.mxu0
    %109 = vmatpush.msra.mxu0 0.0
    %110 = vmatpush.msra.mxu0 0.0
    %111 = vmatpush.msra.mxu0 0.0
    %112 = vmatpush.msra.mxu0 0.0
    %113 = vmatpush.msra.mxu0 0.0
    %114 = vmatpush.msra.mxu0 0.0
    %115 = vmatpush.msra.mxu0 0.0
    %116 = vmatpush.msra.mxu0 0.0
    %117 = vmatpush.msra.mxu0 0.0
    %118 = vmatpush.msra.mxu0 0.0
    %119 = vmatpush.msra.mxu0 0.0
    %120 = vmatpush.msra.mxu0 0.0
    %121 = vmatpush.msra.mxu0 %v43
    %122 = vmatpush.msra.mxu0 %v41
    %123 = vmatpush.msra.mxu0 %v39
    %124 = vmatpush.msra.mxu0 %v37
    %125 = vmatmul.f32.gmra.mxu0 %v87
    %v126 = vpop.f32.mrf.mxu0
    %v127 = vadd.f32 0.0, %v126
    %128 = vdwg.mxu0
    %v130 = vrot.slane %v127, 1
    %v131 = vperm.slane %v127, 0
    %v132 = vperm.slane %v130, 0
    %v135 = vadd.f32 %v131, %v68
    %v136 = vadd.f32 %v131, %v69
    %v137 = vadd.f32 %v131, %v70
    %v138 = vadd.f32 %v131, %v71
    %v139 = vadd.f32 %v131, %v72
    %v140 = vadd.f32 %v131, %v73
    %v141 = vadd.f32 %v131, %v74
    %v142 = vadd.f32 %v131, %v75
    %v143 = vadd.f32 %v132, %v76
    %v144 = vadd.f32 %v132, %v77
    %v145 = vadd.f32 %v132, %v78
    %v146 = vadd.f32 %v132, %v79
    %v147 = vadd.f32 %v132, %v80
    %v148 = vadd.f32 %v132, %v81
    %v149 = vadd.f32 %v132, %v82
    %v150 = vadd.f32 %v132, %v83
    %v151 = vtanh.pop %v135
    %v152 = vtanh.pop %v136
    %v153 = vtanh.pop %v137
    %v154 = vtanh.pop %v138
    %v155 = vtanh.pop %v139
    %v156 = vtanh.pop %v140
    %v157 = vtanh.pop %v141
    %v158 = vtanh.pop %v142
    %v159 = vtanh.pop %v143
    %v160 = vtanh.pop %v144
    %v161 = vtanh.pop %v145
    %v162 = vtanh.pop %v146
    %v163 = vtanh.pop %v147
    %v164 = vtanh.pop %v148
    %v165 = vtanh.pop %v149
    %v166 = vtanh.pop %v150
    %v167 = vmul.f32 %v151, %v48
    %v168 = vmul.f32 %v152, %v48
    %v169 = vmul.f32 %v153, %v48
    %v170 = vmul.f32 %v154, %v48
    %v171 = vmul.f32 %v155, %v48
    %v172 = vmul.f32 %v156, %v48
    %v173 = vmul.f32 %v157, %v48
    %v174 = vmul.f32 %v158, %v48
    %v175 = vmul.f32 %v159, %v48
    %v176 = vmul.f32 %v160, %v48
    %v177 = vmul.f32 %v161, %v48
    %v178 = vmul.f32 %v162, %v48
    %v179 = vmul.f32 %v163, %v48
    %v180 = vmul.f32 %v164, %v48
    %v181 = vmul.f32 %v165, %v48
    %v182 = vmul.f32 %v166, %v48
    %v183 = vsel %vm85, %v167, 0.0
    %184 = vadd.xlane.f32.xlu0 %v183
    %v185 = vpop.xlane.xlu0 %184
    %v186 = vsel %vm85, %v168, 0.0
    %187 = vadd.xlane.f32.xlu0 %v186
    %v188 = vpop.xlane.xlu0 %187
    %v189 = vsel %vm85, %v169, 0.0
    %190 = vadd.xlane.f32.xlu0 %v189
    %v191 = vpop.xlane.xlu0 %190
    %v192 = vsel %vm85, %v170, 0.0
    %193 = vadd.xlane.f32.xlu0 %v192
    %v194 = vpop.xlane.xlu0 %193
    %v195 = vsel %vm85, %v171, 0.0
    %196 = vadd.xlane.f32.xlu0 %v195
    %v197 = vpop.xlane.xlu0 %196
    %v198 = vsel %vm85, %v172, 0.0
    %199 = vadd.xlane.f32.xlu0 %v198
    %v200 = vpop.xlane.xlu0 %199
    %v201 = vsel %vm85, %v173, 0.0
    %202 = vadd.xlane.f32.xlu0 %v201
    %v203 = vpop.xlane.xlu0 %202
    %v204 = vsel %vm85, %v174, 0.0
    %205 = vadd.xlane.f32.xlu0 %v204
    %v206 = vpop.xlane.xlu0 %205
    %v207 = vsel %vm85, %v175, 0.0
    %208 = vadd.xlane.f32.xlu0 %v207
    %v209 = vpop.xlane.xlu0 %208
    %v210 = vsel %vm85, %v176, 0.0
    %211 = vadd.xlane.f32.xlu0 %v210
    %v212 = vpop.xlane.xlu0 %211
    %v213 = vsel %vm85, %v177, 0.0
    %214 = vadd.xlane.f32.xlu0 %v213
    %v215 = vpop.xlane.xlu0 %214
    %v216 = vsel %vm85, %v178, 0.0
    %217 = vadd.xlane.f32.xlu0 %v216
    %v218 = vpop.xlane.xlu0 %217
    %v219 = vsel %vm85, %v179, 0.0
    %220 = vadd.xlane.f32.xlu0 %v219
    %v221 = vpop.xlane.xlu0 %220
    %v222 = vsel %vm85, %v180, 0.0
    %223 = vadd.xlane.f32.xlu0 %v222
    %v224 = vpop.xlane.xlu0 %223
    %v225 = vsel %vm85, %v181, 0.0
    %226 = vadd.xlane.f32.xlu0 %v225
    %v227 = vpop.xlane.xlu0 %226
    %v228 = vsel %vm85, %v182, 0.0
    %229 = vadd.xlane.f32.xlu0 %v228
    %v230 = vpop.xlane.xlu0 %229
    %v247 = vlaneseq
    %v248 = vand.u32 %v247, 127
    %v249 = vperm.slane %v185, %v248
    %v250 = vadd.s32 %v248, 4294967288
    %v251 = vperm.slane %v188, %v250
    %vm252 = vcmask 130112
    %v253 = vsel %vm252, %v251, %v249
    %v254 = vadd.s32 %v248, 4294967280
    %v255 = vperm.slane %v191, %v254
    %vm256 = vcmask 195712
    %v257 = vsel %vm256, %v255, %v253
    %v258 = vadd.s32 %v248, 4294967272
    %v259 = vperm.slane %v194, %v258
    %vm260 = vcmask 261312
    %v261 = vsel %vm260, %v259, %v257
    %v262 = vadd.s32 %v248, 4294967264
    %v263 = vperm.slane %v197, %v262
    %vm264 = vcmask 326912
    %v265 = vsel %vm264, %v263, %v261
    %v266 = vadd.s32 %v248, 4294967256
    %v267 = vperm.slane %v200, %v266
    %vm268 = vcmask 392512
    %v269 = vsel %vm268, %v267, %v265
    %v270 = vadd.s32 %v248, 4294967248
    %v271 = vperm.slane %v203, %v270
    %vm272 = vcmask 458112
    %v273 = vsel %vm272, %v271, %v269
    %v274 = vadd.s32 %v248, 4294967240
    %v275 = vperm.slane %v206, %v274
    %vm276 = vcmask 523712
    %v277 = vsel %vm276, %v275, %v273
    %v278 = vperm.slane %v209, %v248
    %v279 = vperm.slane %v212, %v250
    %v280 = vsel %vm252, %v279, %v278
    %v281 = vperm.slane %v215, %v254
    %v282 = vsel %vm256, %v281, %v280
    %v283 = vperm.slane %v218, %v258
    %v284 = vsel %vm260, %v283, %v282
    %v285 = vperm.slane %v221, %v262
    %v286 = vsel %vm264, %v285, %v284
    %v287 = vperm.slane %v224, %v266
    %v288 = vsel %vm268, %v287, %v286
    %v289 = vperm.slane %v227, %v270
    %v290 = vsel %vm272, %v289, %v288
    %v291 = vperm.slane %v230, %v274
    %v292 = vsel %vm276, %v291, %v290
    %vm293 = vcmask 1041409
    %v294 = vsel %vm293, %v292, %v277
    %vm296 = vcmask 517120
    %v297 = vsel %vm296, %v294, -inf
    %298 = vmax.xlane.f32.xlu0 %v297
    %v299 = vpop.xlane.xlu0 %298
    %v301 = vperm.slane %v299, 0
    %v302 = vperm.slane %v299, 1
    %v305 = vsub.f32 %v185, %v301
    %v306 = vsub.f32 %v188, %v301
    %v307 = vsub.f32 %v191, %v301
    %v308 = vsub.f32 %v194, %v301
    %v309 = vsub.f32 %v197, %v301
    %v310 = vsub.f32 %v200, %v301
    %v311 = vsub.f32 %v203, %v301
    %v312 = vsub.f32 %v206, %v301
    %v313 = vsub.f32 %v209, %v302
    %v314 = vsub.f32 %v212, %v302
    %v315 = vsub.f32 %v215, %v302
    %v316 = vsub.f32 %v218, %v302
    %v317 = vsub.f32 %v221, %v302
    %v318 = vsub.f32 %v224, %v302
    %v319 = vsub.f32 %v227, %v302
    %v320 = vsub.f32 %v230, %v302
    %v321 = vmul.f32 %v305, 1.442695
    %v322 = vpow.pop %v321
    %v323 = vmul.f32 %v306, 1.442695
    %v324 = vpow.pop %v323
    %v325 = vmul.f32 %v307, 1.442695
    %v326 = vpow.pop %v325
    %v327 = vmul.f32 %v308, 1.442695
    %v328 = vpow.pop %v327
    %v329 = vmul.f32 %v309, 1.442695
    %v330 = vpow.pop %v329
    %v331 = vmul.f32 %v310, 1.442695
    %v332 = vpow.pop %v331
    %v333 = vmul.f32 %v311, 1.442695
    %v334 = vpow.pop %v333
    %v335 = vmul.f32 %v312, 1.442695
    %v336 = vpow.pop %v335
    %v337 = vmul.f32 %v313, 1.442695
    %v338 = vpow.pop %v337
    %v339 = vmul.f32 %v314, 1.442695
    %v340 = vpow.pop %v339
    %v341 = vmul.f32 %v315, 1.442695
    %v342 = vpow.pop %v341
    %v343 = vmul.f32 %v316, 1.442695
    %v344 = vpow.pop %v343
    %v345 = vmul.f32 %v317, 1.442695
    %v346 = vpow.pop %v345
    %v347 = vmul.f32 %v318, 1.442695
    %v348 = vpow.pop %v347
    %v349 = vmul.f32 %v319, 1.442695
    %v350 = vpow.pop %v349
    %v351 = vmul.f32 %v320, 1.442695
    %v352 = vpow.pop %v351
    %369 = vset.pattern.permute.xlu0 0
    %370 = vperm.xlu0 %369, %v322
    %v371 = vpop.permute.xlu0 %370
    %372 = vset.pattern.permute.xlu0 0
    %373 = vperm.xlu0 %372, %v324
    %v374 = vpop.permute.xlu0 %373
    %375 = vset.pattern.permute.xlu0 0
    %376 = vperm.xlu0 %375, %v326
    %v377 = vpop.permute.xlu0 %376
    %378 = vset.pattern.permute.xlu0 0
    %379 = vperm.xlu0 %378, %v328
    %v380 = vpop.permute.xlu0 %379
    %381 = vset.pattern.permute.xlu0 0
    %382 = vperm.xlu0 %381, %v330
    %v383 = vpop.permute.xlu0 %382
    %384 = vset.pattern.permute.xlu0 0
    %385 = vperm.xlu0 %384, %v332
    %v386 = vpop.permute.xlu0 %385
    %387 = vset.pattern.permute.xlu0 0
    %388 = vperm.xlu0 %387, %v334
    %v389 = vpop.permute.xlu0 %388
    %390 = vset.pattern.permute.xlu0 0
    %391 = vperm.xlu0 %390, %v336
    %v392 = vpop.permute.xlu0 %391
    %393 = vset.pattern.permute.xlu0 0
    %394 = vperm.xlu0 %393, %v338
    %v395 = vpop.permute.xlu0 %394
    %396 = vset.pattern.permute.xlu0 0
    %397 = vperm.xlu0 %396, %v340
    %v398 = vpop.permute.xlu0 %397
    %399 = vset.pattern.permute.xlu0 0
    %400 = vperm.xlu0 %399, %v342
    %v401 = vpop.permute.xlu0 %400
    %402 = vset.pattern.permute.xlu0 0
    %403 = vperm.xlu0 %402, %v344
    %v404 = vpop.permute.xlu0 %403
    %405 = vset.pattern.permute.xlu0 0
    %406 = vperm.xlu0 %405, %v346
    %v407 = vpop.permute.xlu0 %406
    %408 = vset.pattern.permute.xlu0 0
    %409 = vperm.xlu0 %408, %v348
    %v410 = vpop.permute.xlu0 %409
    %411 = vset.pattern.permute.xlu0 0
    %412 = vperm.xlu0 %411, %v350
    %v413 = vpop.permute.xlu0 %412
    %414 = vset.pattern.permute.xlu0 0
    %415 = vperm.xlu0 %414, %v352
    %v416 = vpop.permute.xlu0 %415
    %v417 = vperm.slane %v371, %v248
    %v418 = vperm.slane %v374, %v250
    %v419 = vsel %vm252, %v418, %v417
    %v420 = vperm.slane %v377, %v254
    %v421 = vsel %vm256, %v420, %v419
    %v422 = vperm.slane %v380, %v258
    %v423 = vsel %vm260, %v422, %v421
    %v424 = vperm.slane %v383, %v262
    %v425 = vsel %vm264, %v424, %v423
    %v426 = vperm.slane %v386, %v266
    %v427 = vsel %vm268, %v426, %v425
    %v428 = vperm.slane %v389, %v270
    %v429 = vsel %vm272, %v428, %v427
    %v430 = vperm.slane %v392, %v274
    %v431 = vsel %vm276, %v430, %v429
    %v432 = vperm.slane %v395, %v248
    %v433 = vperm.slane %v398, %v250
    %v434 = vsel %vm252, %v433, %v432
    %v435 = vperm.slane %v401, %v254
    %v436 = vsel %vm256, %v435, %v434
    %v437 = vperm.slane %v404, %v258
    %v438 = vsel %vm260, %v437, %v436
    %v439 = vperm.slane %v407, %v262
    %v440 = vsel %vm264, %v439, %v438
    %v441 = vperm.slane %v410, %v266
    %v442 = vsel %vm268, %v441, %v440
    %v443 = vperm.slane %v413, %v270
    %v444 = vsel %vm272, %v443, %v442
    %v445 = vperm.slane %v416, %v274
    %v446 = vsel %vm276, %v445, %v444
    %v447 = vsel %vm293, %v446, %v431
    %v449 = vsel %vm296, %v447, 0.0
    %450 = vadd.xlane.f32.xlu0 %v449
    %v451 = vpop.xlane.xlu0 %450
    %v453 = vperm.slane %v84, 0
    %v454 = vlaneseq
    %v455 = vshrl.u32 %v454, 7
    %457 = vset.pattern.permute.xlu0 %v455
    %458 = vperm.xlu0 %457, %v453
    %v459 = vpop.permute.xlu0 %458
    %v460 = vlaneseq
    %v461 = vshrl.u32 %v460, 7
    %v462 = vadd.s32 %v461, 8
    %463 = vset.pattern.permute.xlu0 %v462
    %464 = vperm.xlu0 %463, %v453
    %v465 = vpop.permute.xlu0 %464
    %v466 = vlaneseq
    %v467 = vshrl.u32 %v466, 7
    %v468 = vadd.s32 %v467, 16
    %469 = vset.pattern.permute.xlu0 %v468
    %470 = vperm.xlu0 %469, %v453
    %v471 = vpop.permute.xlu0 %470
    %v472 = vlaneseq
    %v473 = vshrl.u32 %v472, 7
    %v474 = vadd.s32 %v473, 24
    %475 = vset.pattern.permute.xlu0 %v474
    %476 = vperm.xlu0 %475, %v453
    %v477 = vpop.permute.xlu0 %476
    %v478 = vlaneseq
    %v479 = vshrl.u32 %v478, 7
    %v480 = vadd.s32 %v479, 32
    %481 = vset.pattern.permute.xlu0 %v480
    %482 = vperm.xlu0 %481, %v453
    %v483 = vpop.permute.xlu0 %482
    %v484 = vlaneseq
    %v485 = vshrl.u32 %v484, 7
    %v486 = vadd.s32 %v485, 40
    %487 = vset.pattern.permute.xlu0 %v486
    %488 = vperm.xlu0 %487, %v453
    %v489 = vpop.permute.xlu0 %488
    %v490 = vlaneseq
    %v491 = vshrl.u32 %v490, 7
    %v492 = vadd.s32 %v491, 48
    %493 = vset.pattern.permute.xlu0 %v492
    %494 = vperm.xlu0 %493, %v453
    %v495 = vpop.permute.xlu0 %494
    %v496 = vlaneseq
    %v497 = vshrl.u32 %v496, 7
    %v498 = vadd.s32 %v497, 56
    %499 = vset.pattern.permute.xlu0 %v498
    %500 = vperm.xlu0 %499, %v453
    %v501 = vpop.permute.xlu0 %500
    %v502 = vperm.slane %v84, 1
    %v503 = vlaneseq
    %v504 = vshrl.u32 %v503, 7
    %506 = vset.pattern.permute.xlu0 %v504
    %507 = vperm.xlu0 %506, %v502
    %v508 = vpop.permute.xlu0 %507
    %v509 = vlaneseq
    %v510 = vshrl.u32 %v509, 7
    %v511 = vadd.s32 %v510, 8
    %512 = vset.pattern.permute.xlu0 %v511
    %513 = vperm.xlu0 %512, %v502
    %v514 = vpop.permute.xlu0 %513
    %v515 = vlaneseq
    %v516 = vshrl.u32 %v515, 7
    %v517 = vadd.s32 %v516, 16
    %518 = vset.pattern.permute.xlu0 %v517
    %519 = vperm.xlu0 %518, %v502
    %v520 = vpop.permute.xlu0 %519
    %v521 = vlaneseq
    %v522 = vshrl.u32 %v521, 7
    %v523 = vadd.s32 %v522, 24
    %524 = vset.pattern.permute.xlu0 %v523
    %525 = vperm.xlu0 %524, %v502
    %v526 = vpop.permute.xlu0 %525
    %v527 = vlaneseq
    %v528 = vshrl.u32 %v527, 7
    %v529 = vadd.s32 %v528, 32
    %530 = vset.pattern.permute.xlu0 %v529
    %531 = vperm.xlu0 %530, %v502
    %v532 = vpop.permute.xlu0 %531
    %v533 = vlaneseq
    %v534 = vshrl.u32 %v533, 7
    %v535 = vadd.s32 %v534, 40
    %536 = vset.pattern.permute.xlu0 %v535
    %537 = vperm.xlu0 %536, %v502
    %v538 = vpop.permute.xlu0 %537
    %v539 = vlaneseq
    %v540 = vshrl.u32 %v539, 7
    %v541 = vadd.s32 %v540, 48
    %542 = vset.pattern.permute.xlu0 %v541
    %543 = vperm.xlu0 %542, %v502
    %v544 = vpop.permute.xlu0 %543
    %v545 = vlaneseq
    %v546 = vshrl.u32 %v545, 7
    %v547 = vadd.s32 %v546, 56
    %548 = vset.pattern.permute.xlu0 %v547
    %549 = vperm.xlu0 %548, %v502
    %v550 = vpop.permute.xlu0 %549
    %v567 = vmul.f32 %v322, %v459
    %v568 = vmul.f32 %v324, %v465
    %v569 = vmul.f32 %v326, %v471
    %v570 = vmul.f32 %v328, %v477
    %v571 = vmul.f32 %v330, %v483
    %v572 = vmul.f32 %v332, %v489
    %v573 = vmul.f32 %v334, %v495
    %v574 = vmul.f32 %v336, %v501
    %v575 = vmul.f32 %v338, %v508
    %v576 = vmul.f32 %v340, %v514
    %v577 = vmul.f32 %v342, %v520
    %v578 = vmul.f32 %v344, %v526
    %v579 = vmul.f32 %v346, %v532
    %v580 = vmul.f32 %v348, %v538
    %v581 = vmul.f32 %v350, %v544
    %v582 = vmul.f32 %v352, %v550
    %599 = vset.pattern.permute.xlu0 0
    %600 = vperm.xlu0 %599, %v567
    %v601 = vpop.permute.xlu0 %600
    %602 = vset.pattern.permute.xlu0 0
    %603 = vperm.xlu0 %602, %v568
    %v604 = vpop.permute.xlu0 %603
    %605 = vset.pattern.permute.xlu0 0
    %606 = vperm.xlu0 %605, %v569
    %v607 = vpop.permute.xlu0 %606
    %608 = vset.pattern.permute.xlu0 0
    %609 = vperm.xlu0 %608, %v570
    %v610 = vpop.permute.xlu0 %609
    %611 = vset.pattern.permute.xlu0 0
    %612 = vperm.xlu0 %611, %v571
    %v613 = vpop.permute.xlu0 %612
    %614 = vset.pattern.permute.xlu0 0
    %615 = vperm.xlu0 %614, %v572
    %v616 = vpop.permute.xlu0 %615
    %617 = vset.pattern.permute.xlu0 0
    %618 = vperm.xlu0 %617, %v573
    %v619 = vpop.permute.xlu0 %618
    %620 = vset.pattern.permute.xlu0 0
    %621 = vperm.xlu0 %620, %v574
    %v622 = vpop.permute.xlu0 %621
    %623 = vset.pattern.permute.xlu0 0
    %624 = vperm.xlu0 %623, %v575
    %v625 = vpop.permute.xlu0 %624
    %626 = vset.pattern.permute.xlu0 0
    %627 = vperm.xlu0 %626, %v576
    %v628 = vpop.permute.xlu0 %627
    %629 = vset.pattern.permute.xlu0 0
    %630 = vperm.xlu0 %629, %v577
    %v631 = vpop.permute.xlu0 %630
    %632 = vset.pattern.permute.xlu0 0
    %633 = vperm.xlu0 %632, %v578
    %v634 = vpop.permute.xlu0 %633
    %635 = vset.pattern.permute.xlu0 0
    %636 = vperm.xlu0 %635, %v579
    %v637 = vpop.permute.xlu0 %636
    %638 = vset.pattern.permute.xlu0 0
    %639 = vperm.xlu0 %638, %v580
    %v640 = vpop.permute.xlu0 %639
    %641 = vset.pattern.permute.xlu0 0
    %642 = vperm.xlu0 %641, %v581
    %v643 = vpop.permute.xlu0 %642
    %644 = vset.pattern.permute.xlu0 0
    %645 = vperm.xlu0 %644, %v582
    %v646 = vpop.permute.xlu0 %645
    %v647 = vperm.slane %v601, %v248
    %v648 = vperm.slane %v604, %v250
    %v649 = vsel %vm252, %v648, %v647
    %v650 = vperm.slane %v607, %v254
    %v651 = vsel %vm256, %v650, %v649
    %v652 = vperm.slane %v610, %v258
    %v653 = vsel %vm260, %v652, %v651
    %v654 = vperm.slane %v613, %v262
    %v655 = vsel %vm264, %v654, %v653
    %v656 = vperm.slane %v616, %v266
    %v657 = vsel %vm268, %v656, %v655
    %v658 = vperm.slane %v619, %v270
    %v659 = vsel %vm272, %v658, %v657
    %v660 = vperm.slane %v622, %v274
    %v661 = vsel %vm276, %v660, %v659
    %v662 = vperm.slane %v625, %v248
    %v663 = vperm.slane %v628, %v250
    %v664 = vsel %vm252, %v663, %v662
    %v665 = vperm.slane %v631, %v254
    %v666 = vsel %vm256, %v665, %v664
    %v667 = vperm.slane %v634, %v258
    %v668 = vsel %vm260, %v667, %v666
    %v669 = vperm.slane %v637, %v262
    %v670 = vsel %vm264, %v669, %v668
    %v671 = vperm.slane %v640, %v266
    %v672 = vsel %vm268, %v671, %v670
    %v673 = vperm.slane %v643, %v270
    %v674 = vsel %vm272, %v673, %v672
    %v675 = vperm.slane %v646, %v274
    %v676 = vsel %vm276, %v675, %v674
    %v677 = vsel %vm293, %v676, %v661
    %v679 = vsel %vm296, %v677, 0.0
    %680 = vadd.xlane.f32.xlu0 %v679
    %v681 = vpop.xlane.xlu0 %680
    %v698 = vmul.f32 %v601, %v52
    %v699 = vmul.f32 %v604, %v53
    %v700 = vmul.f32 %v607, %v54
    %v701 = vmul.f32 %v610, %v55
    %v702 = vmul.f32 %v613, %v56
    %v703 = vmul.f32 %v616, %v57
    %v704 = vmul.f32 %v619, %v58
    %v705 = vmul.f32 %v622, %v59
    %v706 = vmul.f32 %v625, %v60
    %v707 = vmul.f32 %v628, %v61
    %v708 = vmul.f32 %v631, %v62
    %v709 = vmul.f32 %v634, %v63
    %v710 = vmul.f32 %v637, %v64
    %v711 = vmul.f32 %v640, %v65
    %v712 = vmul.f32 %v643, %v66
    %v713 = vmul.f32 %v646, %v67
    %v714 = vsel %vm85, %v698, 0.0
    %v715 = vsel %vm85, %v699, 0.0
    %v716 = vadd.f32 %v714, %v715
    %v717 = vsel %vm85, %v700, 0.0
    %v718 = vadd.f32 %v716, %v717
    %v719 = vsel %vm85, %v701, 0.0
    %v720 = vadd.f32 %v718, %v719
    %v721 = vsel %vm85, %v702, 0.0
    %v722 = vadd.f32 %v720, %v721
    %v723 = vsel %vm85, %v703, 0.0
    %v724 = vadd.f32 %v722, %v723
    %v725 = vsel %vm85, %v704, 0.0
    %v726 = vadd.f32 %v724, %v725
    %v727 = vsel %vm85, %v705, 0.0
    %v728 = vadd.f32 %v726, %v727
    %v729 = vrot.slane %v728, 4
    %v730 = vadd.f32 %v728, %v729
    %v731 = vrot.slane %v730, 2
    %v732 = vadd.f32 %v730, %v731
    %v733 = vrot.slane %v732, 1
    %v734 = vadd.f32 %v732, %v733
    %v735 = vsel %vm85, %v706, 0.0
    %v736 = vsel %vm85, %v707, 0.0
    %v737 = vadd.f32 %v735, %v736
    %v738 = vsel %vm85, %v708, 0.0
    %v739 = vadd.f32 %v737, %v738
    %v740 = vsel %vm85, %v709, 0.0
    %v741 = vadd.f32 %v739, %v740
    %v742 = vsel %vm85, %v710, 0.0
    %v743 = vadd.f32 %v741, %v742
    %v744 = vsel %vm85, %v711, 0.0
    %v745 = vadd.f32 %v743, %v744
    %v746 = vsel %vm85, %v712, 0.0
    %v747 = vadd.f32 %v745, %v746
    %v748 = vsel %vm85, %v713, 0.0
    %v749 = vadd.f32 %v747, %v748
    %v750 = vrot.slane %v749, 4
    %v751 = vadd.f32 %v749, %v750
    %v752 = vrot.slane %v751, 2
    %v753 = vadd.f32 %v751, %v752
    %v754 = vrot.slane %v753, 1
    %v755 = vadd.f32 %v753, %v754
    %v756 = vmul.f32 %v451, 1e-05
    %v757 = vmax.f32 %v681, %v756
    %v759 = vrot.slane %v757, 1
    %v762 = vrcp.pop %v757
    %v763 = vmul.f32 %v757, %v762
    %v764 = vsub.f32 1.0, %v763
    %v765 = vmul.f32 %v762, %v764
    %v766 = vadd.f32 %v762, %v765
    %vm767 = vweird.f32 %v757
    %vm768 = vweird.f32 %v762
    %vm769 = vmor %vm767, %vm768
    %v770 = vsel %vm769, %v762, %v766
    %v771 = vand.u32 2147483647, %v757
    %vm772 = vcmp.eq.f32.partialorder %v771, 8.507059e+37
    %v773 = vand.u32 %v757, 2147483648
    %v774 = vor.u32 1.1754944e-38, %v773
    %v775 = vsel %vm772, %v774, %v770
    %v776 = vmul.f32 %v734, %v775
    %v777 = vrcp.pop %v759
    %v778 = vmul.f32 %v759, %v777
    %v779 = vsub.f32 1.0, %v778
    %v780 = vmul.f32 %v777, %v779
    %v781 = vadd.f32 %v777, %v780
    %vm782 = vweird.f32 %v759
    %vm783 = vweird.f32 %v777
    %vm784 = vmor %vm782, %vm783
    %v785 = vsel %vm784, %v777, %v781
    %v786 = vand.u32 2147483647, %v759
    %vm787 = vcmp.eq.f32.partialorder %v786, 8.507059e+37
    %v788 = vand.u32 %v759, 2147483648
    %v789 = vor.u32 1.1754944e-38, %v788
    %v790 = vsel %vm787, %v789, %v785
    %v791 = vmul.f32 %v755, %v790
    %v794 = vrot.slane %v791, 7
    %v795 = vsel %vm293, %v794, %v776
    %v796 = vsel %vm85, %v795, 0
    %798 = vmatpush.msra.mxu0 0.0
    %799 = vmatpush.msra.mxu0 0.0
    %800 = vmatpush.msra.mxu0 0.0
    %801 = vmatpush.msra.mxu0 0.0
    %802 = vmatpush.msra.mxu0 0.0
    %803 = vmatpush.msra.mxu0 0.0
    %804 = vmatpush.msra.mxu0 0.0
    %805 = vmatpush.msra.mxu0 0.0
    %806 = vmatpush.msra.mxu0 0.0
    %807 = vmatpush.msra.mxu0 0.0
    %808 = vmatpush.msra.mxu0 0.0
    %809 = vmatpush.msra.mxu0 0.0
    %810 = vmatpush.msra.mxu0 %v47
    %811 = vmatpush.msra.mxu0 %v46
    %812 = vmatpush.msra.mxu0 %v45
    %813 = vmatpush.msra.mxu0 %v44
    %814 = vmatmul.f32.gmra.mxu0 %v796
    %v815 = vpop.f32.mrf.mxu0
    %v816 = vadd.f32 %v107, %v815
    %817 = vdwg.mxu0
    %v818 = vadd.f32 %v816, %v49
    %v819 = vxor.u32 %v818, 2147483648
    %v820 = vmul.f32 %v819, 1.442695
    %v821 = vpow.pop %v820
    %v822 = vadd.f32 %v821, 1.0
    %v823 = vrcp.pop %v822
    %v824 = vmul.f32 %v822, %v823
    %v825 = vsub.f32 1.0, %v824
    %v826 = vmul.f32 %v823, %v825
    %v827 = vadd.f32 %v823, %v826
    %vm828 = vweird.f32 %v822
    %vm829 = vweird.f32 %v823
    %vm830 = vmor %vm828, %vm829
    %v831 = vsel %vm830, %v823, %v827
    %v832 = vand.u32 2147483647, %v822
    %vm833 = vcmp.eq.f32.partialorder %v832, 8.507059e+37
    %v834 = vand.u32 %v822, 2147483648
    %v835 = vor.u32 1.1754944e-38, %v834
    %v836 = vsel %vm833, %v835, %v831
    %v837 = vmul.f32 1.0, %v836
    %v838 = vtanh.pop %v818
    %840 = vrot.lane.b32.xlu0 %v51, 32
    %v841 = vpop.permute.xlu0 %840
    %v843 = vmul.f32 %v837, %v841
    %845 = vrot.lane.b32.xlu0 %v838, 64
    %v846 = vpop.permute.xlu0 %845
    %v848 = vmul.f32 %v837, %v846
    %850 = vrot.lane.b32.xlu0 %v848, 32
    %v851 = vpop.permute.xlu0 %850
    %v853 = vadd.f32 %v843, %v851
    %v854 = vtanh.pop %v853
    %856 = vrot.lane.b32.xlu0 %v854, 64
    %v857 = vpop.permute.xlu0 %856
    %v859 = vmul.f32 %v837, %v857
    %861 = vrot.lane.b32.xlu0 %v859, 32
    %v862 = vpop.permute.xlu0 %861
    %vm864 = vcmask 254976
    %865 = vst.msk [vmem:[#allocation2] sm:$0x3] %vm864, %v862
    %867 = vrot.lane.b32.xlu0 %v853, 96
    %v868 = vpop.permute.xlu0 %867
    %870 = vst.msk [vmem:[#allocation3] sm:$0x3] %vm864, %v868
    %871 = vst.msk [vmem:[#allocation4] sm:$0x3] %vm864, %v862
    %872 = vst.msk [vmem:[#allocation6] sm:$0x3] %vm864, %v868
    // Predicated region
    $region30: #{tpu_custom_call.1} parent=1 // pred_check
      _
    $region31: #{tpu_custom_call.1} parent=1 // pred_check_branch
      %874 = sbr.rel (0) target = $region33
    $region32: #{tpu_custom_call.1} parent=1 // pred_region
      %876 = vsyncadd [#allocation5], 0
      %s878 = sshll.u32 [#allocation4], 4
      %s879 = int_to_ptr.vmem [resolvable:$true] %s878
      %s880 = sshll.u32 %s6, 4
      %s881 = int_to_ptr.hbm [resolvable:$true] %s880
      %883 = dma.vmem_to_hbm [thread:$0]  %s879, 32, %s881, [#allocation5]
    $region33: #{tpu_custom_call.1} parent=1 // pred_fallthru
      _
    // Predicated region
    $region34: #{tpu_custom_call.1} parent=1 // pred_check
      _
    $region35: #{tpu_custom_call.1} parent=1 // pred_check_branch
      %885 = sbr.rel (0) target = $region37
    $region36: #{tpu_custom_call.1} parent=1 // pred_region
      %887 = vsyncadd [#allocation7], 0
      %s889 = sshll.u32 [#allocation6], 4
      %s890 = int_to_ptr.vmem [resolvable:$true] %s889
      %s891 = sshll.u32 %s7, 4
      %s892 = int_to_ptr.hbm [resolvable:$true] %s891
      %894 = dma.vmem_to_hbm [thread:$0]  %s890, 32, %s892, [#allocation7]
    $region37: #{tpu_custom_call.1} parent=1 // pred_fallthru
      _
    // Predicated region
    $region38: #{tpu_custom_call.1} parent=1 // pred_check
      _
    $region39: #{tpu_custom_call.1} parent=1 // pred_check_branch
      %896 = sbr.rel (0) target = $region41
    $region40: #{tpu_custom_call.1} parent=1 // pred_region
      %898 = dma.done [#allocation5], 32
    $region41: #{tpu_custom_call.1} parent=1 // pred_fallthru
      _
    // Predicated region
    $region42: #{tpu_custom_call.1} parent=1 // pred_check
      _
    $region43: #{tpu_custom_call.1} parent=1 // pred_check_branch
      %900 = sbr.rel (0) target = $region45
    $region44: #{tpu_custom_call.1} parent=1 // pred_region
      %902 = dma.done [#allocation7], 32
    $region45: #{tpu_custom_call.1} parent=1 // pred_fallthru
      _
    %903 = vsyncpa [#allocation5], 1
    %904 = vsyncpa [#allocation7], 1

</llo_original>
